<compile_context>
chip_gen: v7x
topology: tpu7x:2x2x1
jax: 0.10.0
libtpu: 0.0.40
codegen_flags: <defaults>
</compile_context>

<pallas_src>
import jax
import jax.numpy as jnp
from jax.experimental import pallas as pl
from jax.experimental.pallas import tpu as pltpu

# ---------------- problem constants (mirror the PyTorch __init__) -----------
BATCH = 2
CHANNELS = 4
SPATIAL = 16
FEAT = CHANNELS * SPATIAL * SPATIAL      # 1024
EMBED_DIM = 32
NUM_CLASSES = 52                          # 26 upper + 26 lower (case_sensitive)
VOCAB = 64
SEQ = 8
TARGET_TEXT = "a"
TARGET_FONT = "Arial"
CASE_SENSITIVE = True
ROTATE = True
OUT_LANES = 128                           # lane-dense packed-scalar output


def char_mapping(char: str, case_sensitive: bool = True) -> int:
    if char.isupper():
        return ord(char) - ord("A")
    elif char.islower():
        if case_sensitive:
            return ord(char) - ord("a") + 26
        return ord(char) - ord("a")
    raise ValueError("target_text must be a letter")


def fold_rotation_into_weight(w_img, channels=CHANNELS, spatial=SPATIAL):
    """flatten(rot180(x)) @ W == flatten(x) @ fold(W).

    rot180 reverses the H*W block within each channel of the flattened
    feature, so reversing each channel's H*W block of *rows* of W once
    (static, amortized) removes the activation-side flip.
    """
    d = w_img.shape[-1]
    w = w_img.reshape(channels, spatial * spatial, d)
    return w[:, ::-1, :].reshape(channels * spatial * spatial, d)


def build_text_features(font_name: str) -> jnp.ndarray:
    # Stand-in for the open_clip tokenizer: deterministic byte tokens, padded,
    # turned into a single mean-of-one-hot feature row (1, VOCAB).  All batch
    # rows of the original were identical, so only one row is needed.
    toks = [ord(c) % VOCAB for c in font_name][:SEQ]
    toks = toks + [0] * (SEQ - len(toks))
    toks = jnp.asarray(toks, dtype=jnp.int32)                       # (SEQ,)
    onehot = jax.nn.one_hot(toks, VOCAB, dtype=jnp.float32)         # (SEQ, V)
    return jnp.mean(onehot, axis=0, keepdims=True)                  # (1, V)


def build_combined_weight(w_img, w_txt, w_cls, txt_feat, rotate=True):
    """Fold rot180, the text branch, the image projection and the
    classification head into a single (FEAT, NUM_CLASSES + 1) bf16 weight.

    Column j < NUM_CLASSES : classification logit j.
    Column   NUM_CLASSES   : per-row text/image similarity contribution.
    All products are done in f32; a single bf16 cast at the end.
    """
    w_img_eff = fold_rotation_into_weight(w_img) if rotate else w_img  # (F, D)
    txt_emb = txt_feat @ w_txt                                          # (1, D)
    head = w_img_eff @ w_cls                                            # (F, 52)
    sim_vec = w_img_eff @ txt_emb.T                                     # (F, 1)
    return jnp.concatenate([head, sim_vec], axis=1).astype(jnp.bfloat16)


# ---------------------------- Pallas kernel ---------------------------------
def _font_class_loss_kernel(label_ref, img_ref, wcomb_ref, out_ref):
    label = label_ref[0]                                   # SMEM scalar

    # bf16 cast in-kernel (free on idle VPU slots), single MXU matmul with
    # f32 accumulation.
    img = img_ref[...].astype(jnp.bfloat16)                # (B, F)
    y = jnp.dot(img, wcomb_ref[...],
                preferred_element_type=jnp.float32)        # (B, 53) f32

    col = jax.lax.broadcasted_iota(jnp.int32, y.shape, 1)
    is_cls = col < NUM_CLASSES

    # cross entropy vs. the constant label (repeated over the batch), mean
    # reduction -- matches nn.CrossEntropyLoss defaults.  The similarity
    # column is masked out of max / sum-exp.
    neg_big = jnp.float32(-1e30)
    m = jnp.max(jnp.where(is_cls, y, neg_big), axis=-1, keepdims=True)
    e = jnp.where(is_cls, jnp.exp(y - m), 0.0)
    lse = jnp.log(jnp.sum(e, axis=-1, keepdims=True)) + m
    correct = jnp.sum(jnp.where(col == label, y, 0.0), axis=-1, keepdims=True)
    ce = jnp.mean(lse - correct)

    # diag(text @ img.T).sum() == sum over batch of the folded sim column.
    sim = jnp.sum(jnp.where(col == NUM_CLASSES, y, 0.0))

    # lane-dense packed-scalar output: lane 0 = ce, lane 1 = sim, rest = 0.
    pos = jax.lax.broadcasted_iota(jnp.int32, out_ref.shape, 1)
    out_ref[...] = jnp.where(pos == 0, ce, jnp.where(pos == 1, sim, 0.0))


def font_class_loss(x, w_comb, label_arr):
    """x: (B, C, H, W) float32.  w_comb: (FEAT, 53) bf16.  label_arr: (1,) i32."""
    b = x.shape[0]
    img_flat = x.reshape(b, -1)                             # (B, FEAT) f32
    n_comb = w_comb.shape[1]

    flops = 2 * b * FEAT * n_comb
    bytes_accessed = (img_flat.size * 4 + w_comb.size * 2
                      + label_arr.size * 4 + OUT_LANES * 4)

    out = pl.pallas_call(
        _font_class_loss_kernel,
        out_shape=jax.ShapeDtypeStruct((1, OUT_LANES), jnp.float32),
        in_specs=[pl.BlockSpec(memory_space=pltpu.MemorySpace.SMEM),
                  pl.BlockSpec(memory_space=pltpu.MemorySpace.VMEM),
                  pl.BlockSpec(memory_space=pltpu.MemorySpace.VMEM)],
        out_specs=pl.BlockSpec(memory_space=pltpu.MemorySpace.VMEM),
        cost_estimate=pl.CostEstimate(
            flops=flops,
            transcendentals=b * NUM_CLASSES,
            bytes_accessed=bytes_accessed),
    )(label_arr, img_flat, w_comb)

    return out[0, 0], out[0, 1]


# ------------------------------ glue / setup ---------------------------------
if __name__ == "__main__":
    key = jax.random.PRNGKey(0)
    k_x, k_wi, k_wt, k_wc = jax.random.split(key, 4)

    # deterministic synthetic inputs / surrogate weights
    x = jax.random.normal(k_x, (BATCH, CHANNELS, SPATIAL, SPATIAL),
                          dtype=jnp.float32)
    w_img = jax.random.normal(k_wi, (FEAT, EMBED_DIM), dtype=jnp.float32) * 0.02
    w_txt = jax.random.normal(k_wt, (VOCAB, EMBED_DIM), dtype=jnp.float32) * 0.02
    w_cls = jax.random.normal(k_wc, (EMBED_DIM, NUM_CLASSES),
                              dtype=jnp.float32) * 0.1

    # static, off-hot-path setup: rot180 + text branch + head folded into one
    # (FEAT, 53) bf16 weight.
    txt_feat = build_text_features(TARGET_FONT)                       # (1, V)
    w_comb = build_combined_weight(w_img, w_txt, w_cls, txt_feat,
                                   rotate=ROTATE)                     # (F, 53)
    label_arr = jnp.asarray([char_mapping(TARGET_TEXT, CASE_SENSITIVE)],
                            dtype=jnp.int32)

    cls_loss, sim_sum = font_class_loss(x, w_comb, label_arr)
    jax.block_until_ready((cls_loss, sim_sum))
    print("KERNEL_OK")
</pallas_src>

<mosaic_0001>
module attributes {stable_mosaic.version = 11 : i64} {
  func.func @_font_class_loss_kernel(%arg0: memref<1xi32, #tpu.memory_space<smem>>, %arg1: memref<2x1024xf32, #tpu.memory_space<vmem>>, %arg2: memref<1024x53xbf16, #tpu.memory_space<vmem>>, %arg3: memref<1x128xf32, #tpu.memory_space<vmem>>) attributes {dimension_semantics = [], scalar_prefetch = 0 : i64, scratch_operands = 0 : i64, tpu.core_type = #tpu.core_type<tc>} {
    %c0 = arith.constant 0 : index
    %0 = memref.load %arg0[%c0] : memref<1xi32, #tpu.memory_space<smem>>
    %c0_0 = arith.constant 0 : index
    %c0_1 = arith.constant 0 : index
    %1 = vector.load %arg1[%c0_0, %c0_1] : memref<2x1024xf32, #tpu.memory_space<vmem>>, vector<2x1024xf32>
    %2 = arith.truncf %1 : vector<2x1024xf32> to vector<2x1024xbf16>
    %c0_2 = arith.constant 0 : index
    %c0_3 = arith.constant 0 : index
    %3 = vector.load %arg2[%c0_2, %c0_3] : memref<1024x53xbf16, #tpu.memory_space<vmem>>, vector<1024x53xbf16>
    %cst = arith.constant dense<0.000000e+00> : vector<2x53xf32>
    %4 = tpu.matmul %2, %3, %cst {dimension_numbers = #tpu.dot_dimension_numbers<[1], [0], [0], [1], [0, 0, 1, 1], [], []>} : vector<2x1024xbf16>, vector<1024x53xbf16>, vector<2x53xf32> -> vector<2x53xf32>
    %5 = tpu.iota {dimensions = array<i32: 1>} : vector<2x53xi32>
    %c52_i32 = arith.constant 52 : i32
    %6 = vector.broadcast %c52_i32 : i32 to vector<2x53xi32>
    %7 = arith.cmpi slt, %5, %6 : vector<2x53xi32>
    %cst_4 = arith.constant -1.000000e+30 : f32
    %8 = vector.broadcast %cst_4 : f32 to vector<2x53xf32>
    %9 = arith.select %7, %4, %8 : vector<2x53xi1>, vector<2x53xf32>
    %cst_5 = arith.constant dense<0xFF800000> : vector<2xf32>
    %10 = vector.multi_reduction <maximumf>, %9, %cst_5 [1] : vector<2x53xf32> to vector<2xf32>
    %11 = vector.shape_cast %10 : vector<2xf32> to vector<2x1xf32>
    %12 = vector.broadcast %11 : vector<2x1xf32> to vector<2x53xf32>
    %13 = arith.subf %4, %12 : vector<2x53xf32>
    %14 = math.exp %13 : vector<2x53xf32>
    %cst_6 = arith.constant 0.000000e+00 : f32
    %15 = vector.broadcast %cst_6 : f32 to vector<2x53xf32>
    %16 = arith.select %7, %14, %15 : vector<2x53xi1>, vector<2x53xf32>
    %cst_7 = arith.constant dense<0.000000e+00> : vector<2xf32>
    %17 = vector.multi_reduction <add>, %16, %cst_7 [1] : vector<2x53xf32> to vector<2xf32>
    %18 = vector.shape_cast %17 : vector<2xf32> to vector<2x1xf32>
    %19 = math.log %18 : vector<2x1xf32>
    %20 = arith.addf %19, %11 : vector<2x1xf32>
    %21 = vector.broadcast %0 : i32 to vector<2x53xi32>
    %22 = arith.cmpi eq, %5, %21 : vector<2x53xi32>
    %cst_8 = arith.constant 0.000000e+00 : f32
    %23 = vector.broadcast %cst_8 : f32 to vector<2x53xf32>
    %24 = arith.select %22, %4, %23 : vector<2x53xi1>, vector<2x53xf32>
    %cst_9 = arith.constant dense<0.000000e+00> : vector<2xf32>
    %25 = vector.multi_reduction <add>, %24, %cst_9 [1] : vector<2x53xf32> to vector<2xf32>
    %26 = vector.shape_cast %25 : vector<2xf32> to vector<2x1xf32>
    %27 = arith.subf %20, %26 : vector<2x1xf32>
    %28 = vector.shape_cast %27 : vector<2x1xf32> to vector<1x2x1xf32>
    %cst_10 = arith.constant dense<0.000000e+00> : vector<1xf32>
    %29 = vector.multi_reduction <add>, %28, %cst_10 [1, 2] : vector<1x2x1xf32> to vector<1xf32>
    %30 = vector.shape_cast %29 : vector<1xf32> to vector<1x1x1xf32>
    %31 = vector.extract %30[0, 0, 0] : f32 from vector<1x1x1xf32>
    %cst_11 = arith.constant 2.000000e+00 : f32
    %32 = arith.divf %31, %cst_11 : f32
    %c52_i32_12 = arith.constant 52 : i32
    %33 = vector.broadcast %c52_i32_12 : i32 to vector<2x53xi32>
    %34 = arith.cmpi eq, %5, %33 : vector<2x53xi32>
    %cst_13 = arith.constant 0.000000e+00 : f32
    %35 = vector.broadcast %cst_13 : f32 to vector<2x53xf32>
    %36 = arith.select %34, %4, %35 : vector<2x53xi1>, vector<2x53xf32>
    %37 = vector.shape_cast %36 : vector<2x53xf32> to vector<1x2x53xf32>
    %cst_14 = arith.constant dense<0.000000e+00> : vector<1xf32>
    %38 = vector.multi_reduction <add>, %37, %cst_14 [1, 2] : vector<1x2x53xf32> to vector<1xf32>
    %39 = vector.shape_cast %38 : vector<1xf32> to vector<1x1x1xf32>
    %40 = vector.extract %39[0, 0, 0] : f32 from vector<1x1x1xf32>
    %41 = tpu.iota {dimensions = array<i32: 1>} : vector<1x128xi32>
    %c0_i32 = arith.constant 0 : i32
    %42 = vector.broadcast %c0_i32 : i32 to vector<1x128xi32>
    %43 = arith.cmpi eq, %41, %42 : vector<1x128xi32>
    %c1_i32 = arith.constant 1 : i32
    %44 = vector.broadcast %c1_i32 : i32 to vector<1x128xi32>
    %45 = arith.cmpi eq, %41, %44 : vector<1x128xi32>
    %cst_15 = arith.constant 0.000000e+00 : f32
    %46 = vector.broadcast %40 : f32 to vector<1x128xf32>
    %47 = vector.broadcast %cst_15 : f32 to vector<1x128xf32>
    %48 = arith.select %45, %46, %47 : vector<1x128xi1>, vector<1x128xf32>
    %49 = vector.broadcast %32 : f32 to vector<1x128xf32>
    %50 = arith.select %43, %49, %48 : vector<1x128xi1>, vector<1x128xf32>
    %c0_16 = arith.constant 0 : index
    %c0_17 = arith.constant 0 : index
    %51 = vector.load %arg3[%c0_16, %c0_17] : memref<1x128xf32, #tpu.memory_space<vmem>>, vector<1x128xf32>
    tpu.vector_store %arg3[%c0_16, %c0_17], %50 {strides = array<i32>} : memref<1x128xf32, #tpu.memory_space<vmem>>, vector<1x128xf32>,
    return
  }
}

</mosaic_0001>

<llo_original>
// kernel: tpu_custom_call.1
$region0: #{tpu_custom_call.1}
  #allocation0 [shape = 'u32[]', space=smem, size = 0x4, offset = 0x4, fixed_abs, tag = 'smem constant byte address 0x4 - core index']
  #allocation1 [shape = 'u32[144,128]{1,0:T(1,128)}', space=vmem, size = 0x12000, scoped, tag = 'internal scratch']
  #allocation2 [shape = 's32[1]{0:T(128)S(6)}', space=smem, size = 0x200, scoped, tag = 'scoped memory for tpu_custom_call.1']
  %s0 = inlined_call_operand.<no memory space> [shape: s32[1], index: 0, kind: input, shape index: {}]
  %s1 = inlined_call_operand.vmem [shape: f32[2,1024], index: 1, kind: input, shape index: {}]
  %s2 = inlined_call_operand.vmem [shape: bf16[1024,53], index: 2, kind: input, shape index: {}]
  %s3 = inlined_call_operand.hbm [shape: f32[1,128], index: 3, kind: output, shape index: {}]
  %s4 = sld [smem:[#allocation0]]
  $region22: #{tpu_custom_call.1} parent=0
    _
  %s6 = ssub.s32 1, %s4
  %s7 = scalar_select 0, %s6, %s4
  %8 = sst [smem:[#allocation2]] %s0
  $region1: #{tpu_custom_call.1} parent=0
    #allocation3 [shape = 'u8[512]{0}', space=vmem, size = 0x400, scoped, tag = 'output window, operand 0, single buffered']
    #allocation4 [shape = 's32[1]{0}', space=sflag, size = 0x4, scoped, tag = 'scoped memory for tpu_custom_call.1']
    %9 = vsyncpa [#allocation4], 0
    // Predicated region
    $region2: #{tpu_custom_call.1} parent=1 // pred_check
      _
    $region3: #{tpu_custom_call.1} parent=1 // pred_check_branch
      %11 = sbr.rel (0) target = $region5
    $region4: #{tpu_custom_call.1} parent=1 // pred_region
      _
    $region5: #{tpu_custom_call.1} parent=1 // pred_fallthru
      _
    // Predicated region
    $region6: #{tpu_custom_call.1} parent=1 // pred_check
      _
    $region7: #{tpu_custom_call.1} parent=1 // pred_check_branch
      %13 = sbr.rel (0) target = $region9
    $region8: #{tpu_custom_call.1} parent=1 // pred_region
      _
    $region9: #{tpu_custom_call.1} parent=1 // pred_fallthru
      _
    // Predicated region
    $region10: #{tpu_custom_call.1} parent=1 // pred_check
      _
    $region11: #{tpu_custom_call.1} parent=1 // pred_check_branch
      %15 = sbr.rel (0) target = $region13
    $region12: #{tpu_custom_call.1} parent=1 // pred_region
      _
    $region13: #{tpu_custom_call.1} parent=1 // pred_fallthru
      _
    %s17 = sld [smem:[#allocation2]]
    %v18 = vld [vmem:[%s1] sm:$0xff]
    %v19 = vld [vmem:[%s1 + $0x8] sm:$0xff]
    %v22 = vcombine.high %v18, %v18
    %v24 = vunpack.c.l.s4 1983009808
    %v25 = vunpack.c.0.s8 %v24
    %v26 = vlaneseq
    %v27 = vshrl.u32 %v26, 7
    %v28 = vsub.s32 %v25, %v27
    %v29 = vrot.slane %v18, %v28
    %v31 = vunpack.c.l.s4 1983009808
    %v32 = vunpack.c.0.s8 %v31
    %v33 = vlaneseq
    %v34 = vshrl.u32 %v33, 7
    %v35 = vsub.s32 %v32, %v34
    %v36 = vrot.slane %v22, %v35
    %v37 = vcombine.high %v29, %v29
    %v38 = vcombine.high %v36, %v36
    %v39 = vcombine.high %v19, %v19
    %v41 = vunpack.c.l.s4 1983009808
    %v42 = vunpack.c.0.s8 %v41
    %v43 = vlaneseq
    %v44 = vshrl.u32 %v43, 7
    %v45 = vsub.s32 %v42, %v44
    %v46 = vrot.slane %v19, %v45
    %v48 = vunpack.c.l.s4 1983009808
    %v49 = vunpack.c.0.s8 %v48
    %v50 = vlaneseq
    %v51 = vshrl.u32 %v50, 7
    %v52 = vsub.s32 %v49, %v51
    %v53 = vrot.slane %v39, %v52
    %v54 = vcombine.high %v46, %v46
    %v55 = vcombine.high %v53, %v53
    %v64 = vpack.c.bf16 %v29, %v29
    %v65 = vpack.c.bf16 %v37, %v37
    %v66 = vpack.c.bf16 %v36, %v36
    %v67 = vpack.c.bf16 %v38, %v38
    %v68 = vpack.c.bf16 %v46, %v46
    %v69 = vpack.c.bf16 %v54, %v54
    %v70 = vpack.c.bf16 %v53, %v53
    %v71 = vpack.c.bf16 %v55, %v55
    %v72 = vld [vmem:[%s2] sm:$0xf]
    %v73 = vld [vmem:[%s2 + $0x4] sm:$0xf]
    %v74 = vld [vmem:[%s2 + $0x8] sm:$0xf]
    %v75 = vld [vmem:[%s2 + $0xc] sm:$0xf]
    %v76 = vld [vmem:[%s2 + $0x10] sm:$0xf]
    %v77 = vld [vmem:[%s2 + $0x14] sm:$0xf]
    %v78 = vld [vmem:[%s2 + $0x18] sm:$0xf]
    %v79 = vld [vmem:[%s2 + $0x1c] sm:$0xf]
    %v80 = vld [vmem:[%s2 + $0x20] sm:$0xf]
    %v81 = vld [vmem:[%s2 + $0x24] sm:$0xf]
    %v82 = vld [vmem:[%s2 + $0x28] sm:$0xf]
    %v83 = vld [vmem:[%s2 + $0x2c] sm:$0xf]
    %v84 = vld [vmem:[%s2 + $0x30] sm:$0xf]
    %v85 = vld [vmem:[%s2 + $0x34] sm:$0xf]
    %v86 = vld [vmem:[%s2 + $0x38] sm:$0xf]
    %v87 = vld [vmem:[%s2 + $0x3c] sm:$0xf]
    %v88 = vld [vmem:[%s2 + $0x40] sm:$0xf]
    %v89 = vld [vmem:[%s2 + $0x44] sm:$0xf]
    %v90 = vld [vmem:[%s2 + $0x48] sm:$0xf]
    %v91 = vld [vmem:[%s2 + $0x4c] sm:$0xf]
    %v92 = vld [vmem:[%s2 + $0x50] sm:$0xf]
    %v93 = vld [vmem:[%s2 + $0x54] sm:$0xf]
    %v94 = vld [vmem:[%s2 + $0x58] sm:$0xf]
    %v95 = vld [vmem:[%s2 + $0x5c] sm:$0xf]
    %v96 = vld [vmem:[%s2 + $0x60] sm:$0xf]
    %v97 = vld [vmem:[%s2 + $0x64] sm:$0xf]
    %v98 = vld [vmem:[%s2 + $0x68] sm:$0xf]
    %v99 = vld [vmem:[%s2 + $0x6c] sm:$0xf]
    %v100 = vld [vmem:[%s2 + $0x70] sm:$0xf]
    %v101 = vld [vmem:[%s2 + $0x74] sm:$0xf]
    %v102 = vld [vmem:[%s2 + $0x78] sm:$0xf]
    %v103 = vld [vmem:[%s2 + $0x7c] sm:$0xf]
    %v104 = vld [vmem:[%s2 + $0x80] sm:$0xf]
    %v105 = vld [vmem:[%s2 + $0x84] sm:$0xf]
    %v106 = vld [vmem:[%s2 + $0x88] sm:$0xf]
    %v107 = vld [vmem:[%s2 + $0x8c] sm:$0xf]
    %v108 = vld [vmem:[%s2 + $0x90] sm:$0xf]
    %v109 = vld [vmem:[%s2 + $0x94] sm:$0xf]
    %v110 = vld [vmem:[%s2 + $0x98] sm:$0xf]
    %v111 = vld [vmem:[%s2 + $0x9c] sm:$0xf]
    %v112 = vld [vmem:[%s2 + $0xa0] sm:$0xf]
    %v113 = vld [vmem:[%s2 + $0xa4] sm:$0xf]
    %v114 = vld [vmem:[%s2 + $0xa8] sm:$0xf]
    %v115 = vld [vmem:[%s2 + $0xac] sm:$0xf]
    %v116 = vld [vmem:[%s2 + $0xb0] sm:$0xf]
    %v117 = vld [vmem:[%s2 + $0xb4] sm:$0xf]
    %v118 = vld [vmem:[%s2 + $0xb8] sm:$0xf]
    %v119 = vld [vmem:[%s2 + $0xbc] sm:$0xf]
    %v120 = vld [vmem:[%s2 + $0xc0] sm:$0xf]
    %v121 = vld [vmem:[%s2 + $0xc4] sm:$0xf]
    %v122 = vld [vmem:[%s2 + $0xc8] sm:$0xf]
    %v123 = vld [vmem:[%s2 + $0xcc] sm:$0xf]
    %v124 = vld [vmem:[%s2 + $0xd0] sm:$0xf]
    %v125 = vld [vmem:[%s2 + $0xd4] sm:$0xf]
    %v126 = vld [vmem:[%s2 + $0xd8] sm:$0xf]
    %v127 = vld [vmem:[%s2 + $0xdc] sm:$0xf]
    %v128 = vld [vmem:[%s2 + $0xe0] sm:$0xf]
    %v129 = vld [vmem:[%s2 + $0xe4] sm:$0xf]
    %v130 = vld [vmem:[%s2 + $0xe8] sm:$0xf]
    %v131 = vld [vmem:[%s2 + $0xec] sm:$0xf]
    %v132 = vld [vmem:[%s2 + $0xf0] sm:$0xf]
    %v133 = vld [vmem:[%s2 + $0xf4] sm:$0xf]
    %v134 = vld [vmem:[%s2 + $0xf8] sm:$0xf]
    %v135 = vld [vmem:[%s2 + $0xfc] sm:$0xf]
    %v136 = vld [vmem:[%s2 + $0x100] sm:$0xf]
    %v137 = vld [vmem:[%s2 + $0x104] sm:$0xf]
    %v138 = vld [vmem:[%s2 + $0x108] sm:$0xf]
    %v139 = vld [vmem:[%s2 + $0x10c] sm:$0xf]
    %v140 = vld [vmem:[%s2 + $0x110] sm:$0xf]
    %v141 = vld [vmem:[%s2 + $0x114] sm:$0xf]
    %v142 = vld [vmem:[%s2 + $0x118] sm:$0xf]
    %v143 = vld [vmem:[%s2 + $0x11c] sm:$0xf]
    %v144 = vld [vmem:[%s2 + $0x120] sm:$0xf]
    %v145 = vld [vmem:[%s2 + $0x124] sm:$0xf]
    %v146 = vld [vmem:[%s2 + $0x128] sm:$0xf]
    %v147 = vld [vmem:[%s2 + $0x12c] sm:$0xf]
    %v148 = vld [vmem:[%s2 + $0x130] sm:$0xf]
    %v149 = vld [vmem:[%s2 + $0x134] sm:$0xf]
    %v150 = vld [vmem:[%s2 + $0x138] sm:$0xf]
    %v151 = vld [vmem:[%s2 + $0x13c] sm:$0xf]
    %v152 = vld [vmem:[%s2 + $0x140] sm:$0xf]
    %v153 = vld [vmem:[%s2 + $0x144] sm:$0xf]
    %v154 = vld [vmem:[%s2 + $0x148] sm:$0xf]
    %v155 = vld [vmem:[%s2 + $0x14c] sm:$0xf]
    %v156 = vld [vmem:[%s2 + $0x150] sm:$0xf]
    %v157 = vld [vmem:[%s2 + $0x154] sm:$0xf]
    %v158 = vld [vmem:[%s2 + $0x158] sm:$0xf]
    %v159 = vld [vmem:[%s2 + $0x15c] sm:$0xf]
    %v160 = vld [vmem:[%s2 + $0x160] sm:$0xf]
    %v161 = vld [vmem:[%s2 + $0x164] sm:$0xf]
    %v162 = vld [vmem:[%s2 + $0x168] sm:$0xf]
    %v163 = vld [vmem:[%s2 + $0x16c] sm:$0xf]
    %v164 = vld [vmem:[%s2 + $0x170] sm:$0xf]
    %v165 = vld [vmem:[%s2 + $0x174] sm:$0xf]
    %v166 = vld [vmem:[%s2 + $0x178] sm:$0xf]
    %v167 = vld [vmem:[%s2 + $0x17c] sm:$0xf]
    %v168 = vld [vmem:[%s2 + $0x180] sm:$0xf]
    %v169 = vld [vmem:[%s2 + $0x184] sm:$0xf]
    %v170 = vld [vmem:[%s2 + $0x188] sm:$0xf]
    %v171 = vld [vmem:[%s2 + $0x18c] sm:$0xf]
    %v172 = vld [vmem:[%s2 + $0x190] sm:$0xf]
    %v173 = vld [vmem:[%s2 + $0x194] sm:$0xf]
    %v174 = vld [vmem:[%s2 + $0x198] sm:$0xf]
    %v175 = vld [vmem:[%s2 + $0x19c] sm:$0xf]
    %v176 = vld [vmem:[%s2 + $0x1a0] sm:$0xf]
    %v177 = vld [vmem:[%s2 + $0x1a4] sm:$0xf]
    %v178 = vld [vmem:[%s2 + $0x1a8] sm:$0xf]
    %v179 = vld [vmem:[%s2 + $0x1ac] sm:$0xf]
    %v180 = vld [vmem:[%s2 + $0x1b0] sm:$0xf]
    %v181 = vld [vmem:[%s2 + $0x1b4] sm:$0xf]
    %v182 = vld [vmem:[%s2 + $0x1b8] sm:$0xf]
    %v183 = vld [vmem:[%s2 + $0x1bc] sm:$0xf]
    %v184 = vld [vmem:[%s2 + $0x1c0] sm:$0xf]
    %v185 = vld [vmem:[%s2 + $0x1c4] sm:$0xf]
    %v186 = vld [vmem:[%s2 + $0x1c8] sm:$0xf]
    %v187 = vld [vmem:[%s2 + $0x1cc] sm:$0xf]
    %v188 = vld [vmem:[%s2 + $0x1d0] sm:$0xf]
    %v189 = vld [vmem:[%s2 + $0x1d4] sm:$0xf]
    %v190 = vld [vmem:[%s2 + $0x1d8] sm:$0xf]
    %v191 = vld [vmem:[%s2 + $0x1dc] sm:$0xf]
    %v192 = vld [vmem:[%s2 + $0x1e0] sm:$0xf]
    %v193 = vld [vmem:[%s2 + $0x1e4] sm:$0xf]
    %v194 = vld [vmem:[%s2 + $0x1e8] sm:$0xf]
    %v195 = vld [vmem:[%s2 + $0x1ec] sm:$0xf]
    %v196 = vld [vmem:[%s2 + $0x1f0] sm:$0xf]
    %v197 = vld [vmem:[%s2 + $0x1f4] sm:$0xf]
    %v198 = vld [vmem:[%s2 + $0x1f8] sm:$0xf]
    %v199 = vld [vmem:[%s2 + $0x1fc] sm:$0xf]
    %v328 = vunpack.c.l.b16 %v72
    %v329 = vunpack.c.l.b16 %v73
    %v330 = vunpack.c.l.b16 %v74
    %v331 = vunpack.c.l.b16 %v75
    %v332 = vunpack.c.l.b16 %v76
    %v333 = vunpack.c.l.b16 %v77
    %v334 = vunpack.c.l.b16 %v78
    %v335 = vunpack.c.l.b16 %v79
    %v336 = vunpack.c.l.b16 %v80
    %v337 = vunpack.c.l.b16 %v81
    %v338 = vunpack.c.l.b16 %v82
    %v339 = vunpack.c.l.b16 %v83
    %v340 = vunpack.c.l.b16 %v84
    %v341 = vunpack.c.l.b16 %v85
    %v342 = vunpack.c.l.b16 %v86
    %v343 = vunpack.c.l.b16 %v87
    %v344 = vunpack.c.l.b16 %v88
    %v345 = vunpack.c.l.b16 %v89
    %v346 = vunpack.c.l.b16 %v90
    %v347 = vunpack.c.l.b16 %v91
    %v348 = vunpack.c.l.b16 %v92
    %v349 = vunpack.c.l.b16 %v93
    %v350 = vunpack.c.l.b16 %v94
    %v351 = vunpack.c.l.b16 %v95
    %v352 = vunpack.c.l.b16 %v96
    %v353 = vunpack.c.l.b16 %v97
    %v354 = vunpack.c.l.b16 %v98
    %v355 = vunpack.c.l.b16 %v99
    %v356 = vunpack.c.l.b16 %v100
    %v357 = vunpack.c.l.b16 %v101
    %v358 = vunpack.c.l.b16 %v102
    %v359 = vunpack.c.l.b16 %v103
    %v360 = vunpack.c.l.b16 %v104
    %v361 = vunpack.c.l.b16 %v105
    %v362 = vunpack.c.l.b16 %v106
    %v363 = vunpack.c.l.b16 %v107
    %v364 = vunpack.c.l.b16 %v108
    %v365 = vunpack.c.l.b16 %v109
    %v366 = vunpack.c.l.b16 %v110
    %v367 = vunpack.c.l.b16 %v111
    %v368 = vunpack.c.l.b16 %v112
    %v369 = vunpack.c.l.b16 %v113
    %v370 = vunpack.c.l.b16 %v114
    %v371 = vunpack.c.l.b16 %v115
    %v372 = vunpack.c.l.b16 %v116
    %v373 = vunpack.c.l.b16 %v117
    %v374 = vunpack.c.l.b16 %v118
    %v375 = vunpack.c.l.b16 %v119
    %v376 = vunpack.c.l.b16 %v120
    %v377 = vunpack.c.l.b16 %v121
    %v378 = vunpack.c.l.b16 %v122
    %v379 = vunpack.c.l.b16 %v123
    %v380 = vunpack.c.l.b16 %v124
    %v381 = vunpack.c.l.b16 %v125
    %v382 = vunpack.c.l.b16 %v126
    %v383 = vunpack.c.l.b16 %v127
    %v384 = vunpack.c.l.b16 %v128
    %v385 = vunpack.c.l.b16 %v129
    %v386 = vunpack.c.l.b16 %v130
    %v387 = vunpack.c.l.b16 %v131
    %v388 = vunpack.c.l.b16 %v132
    %v389 = vunpack.c.l.b16 %v133
    %v390 = vunpack.c.l.b16 %v134
    %v391 = vunpack.c.l.b16 %v135
    %v392 = vunpack.c.l.b16 %v136
    %v393 = vunpack.c.l.b16 %v137
    %v394 = vunpack.c.l.b16 %v138
    %v395 = vunpack.c.l.b16 %v139
    %v396 = vunpack.c.l.b16 %v140
    %v397 = vunpack.c.l.b16 %v141
    %v398 = vunpack.c.l.b16 %v142
    %v399 = vunpack.c.l.b16 %v143
    %v400 = vunpack.c.l.b16 %v144
    %v401 = vunpack.c.l.b16 %v145
    %v402 = vunpack.c.l.b16 %v146
    %v403 = vunpack.c.l.b16 %v147
    %v404 = vunpack.c.l.b16 %v148
    %v405 = vunpack.c.l.b16 %v149
    %v406 = vunpack.c.l.b16 %v150
    %v407 = vunpack.c.l.b16 %v151
    %v408 = vunpack.c.l.b16 %v152
    %v409 = vunpack.c.l.b16 %v153
    %v410 = vunpack.c.l.b16 %v154
    %v411 = vunpack.c.l.b16 %v155
    %v412 = vunpack.c.l.b16 %v156
    %v413 = vunpack.c.l.b16 %v157
    %v414 = vunpack.c.l.b16 %v158
    %v415 = vunpack.c.l.b16 %v159
    %v416 = vunpack.c.l.b16 %v160
    %v417 = vunpack.c.l.b16 %v161
    %v418 = vunpack.c.l.b16 %v162
    %v419 = vunpack.c.l.b16 %v163
    %v420 = vunpack.c.l.b16 %v164
    %v421 = vunpack.c.l.b16 %v165
    %v422 = vunpack.c.l.b16 %v166
    %v423 = vunpack.c.l.b16 %v167
    %v424 = vunpack.c.l.b16 %v168
    %v425 = vunpack.c.l.b16 %v169
    %v426 = vunpack.c.l.b16 %v170
    %v427 = vunpack.c.l.b16 %v171
    %v428 = vunpack.c.l.b16 %v172
    %v429 = vunpack.c.l.b16 %v173
    %v430 = vunpack.c.l.b16 %v174
    %v431 = vunpack.c.l.b16 %v175
    %v432 = vunpack.c.l.b16 %v176
    %v433 = vunpack.c.l.b16 %v177
    %v434 = vunpack.c.l.b16 %v178
    %v435 = vunpack.c.l.b16 %v179
    %v436 = vunpack.c.l.b16 %v180
    %v437 = vunpack.c.l.b16 %v181
    %v438 = vunpack.c.l.b16 %v182
    %v439 = vunpack.c.l.b16 %v183
    %v440 = vunpack.c.l.b16 %v184
    %v441 = vunpack.c.l.b16 %v185
    %v442 = vunpack.c.l.b16 %v186
    %v443 = vunpack.c.l.b16 %v187
    %v444 = vunpack.c.l.b16 %v188
    %v445 = vunpack.c.l.b16 %v189
    %v446 = vunpack.c.l.b16 %v190
    %v447 = vunpack.c.l.b16 %v191
    %v448 = vunpack.c.l.b16 %v192
    %v449 = vunpack.c.l.b16 %v193
    %v450 = vunpack.c.l.b16 %v194
    %v451 = vunpack.c.l.b16 %v195
    %v452 = vunpack.c.l.b16 %v196
    %v453 = vunpack.c.l.b16 %v197
    %v454 = vunpack.c.l.b16 %v198
    %v455 = vunpack.c.l.b16 %v199
    %v456 = vpack.c.b16 %v329, %v328
    %v457 = vpack.c.b16 %v331, %v330
    %v458 = vpack.c.b16 %v333, %v332
    %v459 = vpack.c.b16 %v335, %v334
    %v460 = vpack.c.b16 %v337, %v336
    %v461 = vpack.c.b16 %v339, %v338
    %v462 = vpack.c.b16 %v341, %v340
    %v463 = vpack.c.b16 %v343, %v342
    %v464 = vpack.c.b16 %v345, %v344
    %v465 = vpack.c.b16 %v347, %v346
    %v466 = vpack.c.b16 %v349, %v348
    %v467 = vpack.c.b16 %v351, %v350
    %v468 = vpack.c.b16 %v353, %v352
    %v469 = vpack.c.b16 %v355, %v354
    %v470 = vpack.c.b16 %v357, %v356
    %v471 = vpack.c.b16 %v359, %v358
    %v472 = vpack.c.b16 %v361, %v360
    %v473 = vpack.c.b16 %v363, %v362
    %v474 = vpack.c.b16 %v365, %v364
    %v475 = vpack.c.b16 %v367, %v366
    %v476 = vpack.c.b16 %v369, %v368
    %v477 = vpack.c.b16 %v371, %v370
    %v478 = vpack.c.b16 %v373, %v372
    %v479 = vpack.c.b16 %v375, %v374
    %v480 = vpack.c.b16 %v377, %v376
    %v481 = vpack.c.b16 %v379, %v378
    %v482 = vpack.c.b16 %v381, %v380
    %v483 = vpack.c.b16 %v383, %v382
    %v484 = vpack.c.b16 %v385, %v384
    %v485 = vpack.c.b16 %v387, %v386
    %v486 = vpack.c.b16 %v389, %v388
    %v487 = vpack.c.b16 %v391, %v390
    %v488 = vpack.c.b16 %v393, %v392
    %v489 = vpack.c.b16 %v395, %v394
    %v490 = vpack.c.b16 %v397, %v396
    %v491 = vpack.c.b16 %v399, %v398
    %v492 = vpack.c.b16 %v401, %v400
    %v493 = vpack.c.b16 %v403, %v402
    %v494 = vpack.c.b16 %v405, %v404
    %v495 = vpack.c.b16 %v407, %v406
    %v496 = vpack.c.b16 %v409, %v408
    %v497 = vpack.c.b16 %v411, %v410
    %v498 = vpack.c.b16 %v413, %v412
    %v499 = vpack.c.b16 %v415, %v414
    %v500 = vpack.c.b16 %v417, %v416
    %v501 = vpack.c.b16 %v419, %v418
    %v502 = vpack.c.b16 %v421, %v420
    %v503 = vpack.c.b16 %v423, %v422
    %v504 = vpack.c.b16 %v425, %v424
    %v505 = vpack.c.b16 %v427, %v426
    %v506 = vpack.c.b16 %v429, %v428
    %v507 = vpack.c.b16 %v431, %v430
    %v508 = vpack.c.b16 %v433, %v432
    %v509 = vpack.c.b16 %v435, %v434
    %v510 = vpack.c.b16 %v437, %v436
    %v511 = vpack.c.b16 %v439, %v438
    %v512 = vpack.c.b16 %v441, %v440
    %v513 = vpack.c.b16 %v443, %v442
    %v514 = vpack.c.b16 %v445, %v444
    %v515 = vpack.c.b16 %v447, %v446
    %v516 = vpack.c.b16 %v449, %v448
    %v517 = vpack.c.b16 %v451, %v450
    %v518 = vpack.c.b16 %v453, %v452
    %v519 = vpack.c.b16 %v455, %v454
    %584 = vmatprep.subr.bf16.mxu0 0
    %585 = vmatpush1.bf16.msra.mxu0 %v456
    %586 = vmatprep.subr.bf16.mxu0 0
    %587 = vmatpush1.bf16.msra.mxu0 %v457
    %588 = vmatprep.subr.bf16.mxu0 0
    %589 = vmatpush1.bf16.msra.mxu0 %v458
    %590 = vmatprep.subr.bf16.mxu0 0
    %591 = vmatpush1.bf16.msra.mxu0 %v459
    %592 = vmatprep.subr.bf16.mxu0 0
    %593 = vmatpush1.bf16.msra.mxu0 %v460
    %594 = vmatprep.subr.bf16.mxu0 0
    %595 = vmatpush1.bf16.msra.mxu0 %v461
    %596 = vmatprep.subr.bf16.mxu0 0
    %597 = vmatpush1.bf16.msra.mxu0 %v462
    %598 = vmatprep.subr.bf16.mxu0 0
    %599 = vmatpush1.bf16.msra.mxu0 %v463
    %600 = vmatprep.subr.bf16.mxu0 0
    %601 = vmatpush1.bf16.msra.mxu0 %v464
    %602 = vmatprep.subr.bf16.mxu0 0
    %603 = vmatpush1.bf16.msra.mxu0 %v465
    %604 = vmatprep.subr.bf16.mxu0 0
    %605 = vmatpush1.bf16.msra.mxu0 %v466
    %606 = vmatprep.subr.bf16.mxu0 0
    %607 = vmatpush1.bf16.msra.mxu0 %v467
    %608 = vmatprep.subr.bf16.mxu0 0
    %609 = vmatpush1.bf16.msra.mxu0 %v468
    %610 = vmatprep.subr.bf16.mxu0 0
    %611 = vmatpush1.bf16.msra.mxu0 %v469
    %612 = vmatprep.subr.bf16.mxu0 0
    %613 = vmatpush1.bf16.msra.mxu0 %v470
    %614 = vmatprep.subr.bf16.mxu0 0
    %615 = vmatpush1.bf16.msra.mxu0 %v471
    %616 = vmatprep.mubr.bf16.mxu0 %v65
    %617 = vmatmul.mubr.bf16.gmra.mrb[0].mxu0 %v64
    %v618 = vpop.f32.mrb[0].mxu0
    %v619 = vadd.f32 0.0, %v618
    %v620 = vpop.f32.mrb[0].mxu0
    %v621 = vpop.f32.mrb[0].mxu0
    %v622 = vpop.f32.mrb[0].mxu0
    %623 = vdwg.mxu0
    %624 = vmatprep.subr.bf16.mxu0 0
    %625 = vmatpush1.bf16.msra.mxu0 %v472
    %626 = vmatprep.subr.bf16.mxu0 0
    %627 = vmatpush1.bf16.msra.mxu0 %v473
    %628 = vmatprep.subr.bf16.mxu0 0
    %629 = vmatpush1.bf16.msra.mxu0 %v474
    %630 = vmatprep.subr.bf16.mxu0 0
    %631 = vmatpush1.bf16.msra.mxu0 %v475
    %632 = vmatprep.subr.bf16.mxu0 0
    %633 = vmatpush1.bf16.msra.mxu0 %v476
    %634 = vmatprep.subr.bf16.mxu0 0
    %635 = vmatpush1.bf16.msra.mxu0 %v477
    %636 = vmatprep.subr.bf16.mxu0 0
    %637 = vmatpush1.bf16.msra.mxu0 %v478
    %638 = vmatprep.subr.bf16.mxu0 0
    %639 = vmatpush1.bf16.msra.mxu0 %v479
    %640 = vmatprep.subr.bf16.mxu0 0
    %641 = vmatpush1.bf16.msra.mxu0 %v480
    %642 = vmatprep.subr.bf16.mxu0 0
    %643 = vmatpush1.bf16.msra.mxu0 %v481
    %644 = vmatprep.subr.bf16.mxu0 0
    %645 = vmatpush1.bf16.msra.mxu0 %v482
    %646 = vmatprep.subr.bf16.mxu0 0
    %647 = vmatpush1.bf16.msra.mxu0 %v483
    %648 = vmatprep.subr.bf16.mxu0 0
    %649 = vmatpush1.bf16.msra.mxu0 %v484
    %650 = vmatprep.subr.bf16.mxu0 0
    %651 = vmatpush1.bf16.msra.mxu0 %v485
    %652 = vmatprep.subr.bf16.mxu0 0
    %653 = vmatpush1.bf16.msra.mxu0 %v486
    %654 = vmatprep.subr.bf16.mxu0 0
    %655 = vmatpush1.bf16.msra.mxu0 %v487
    %656 = vmatprep.mubr.bf16.mxu0 %v67
    %657 = vmatmul.mubr.bf16.gmra.mrb[0].mxu0 %v66
    %v658 = vpop.f32.mrb[0].mxu0
    %v659 = vadd.f32 %v619, %v658
    %v660 = vpop.f32.mrb[0].mxu0
    %v661 = vpop.f32.mrb[0].mxu0
    %v662 = vpop.f32.mrb[0].mxu0
    %663 = vdwg.mxu0
    %664 = vmatprep.subr.bf16.mxu0 0
    %665 = vmatpush1.bf16.msra.mxu0 %v488
    %666 = vmatprep.subr.bf16.mxu0 0
    %667 = vmatpush1.bf16.msra.mxu0 %v489
    %668 = vmatprep.subr.bf16.mxu0 0
    %669 = vmatpush1.bf16.msra.mxu0 %v490
    %670 = vmatprep.subr.bf16.mxu0 0
    %671 = vmatpush1.bf16.msra.mxu0 %v491
    %672 = vmatprep.subr.bf16.mxu0 0
    %673 = vmatpush1.bf16.msra.mxu0 %v492
    %674 = vmatprep.subr.bf16.mxu0 0
    %675 = vmatpush1.bf16.msra.mxu0 %v493
    %676 = vmatprep.subr.bf16.mxu0 0
    %677 = vmatpush1.bf16.msra.mxu0 %v494
    %678 = vmatprep.subr.bf16.mxu0 0
    %679 = vmatpush1.bf16.msra.mxu0 %v495
    %680 = vmatprep.subr.bf16.mxu0 0
    %681 = vmatpush1.bf16.msra.mxu0 %v496
    %682 = vmatprep.subr.bf16.mxu0 0
    %683 = vmatpush1.bf16.msra.mxu0 %v497
    %684 = vmatprep.subr.bf16.mxu0 0
    %685 = vmatpush1.bf16.msra.mxu0 %v498
    %686 = vmatprep.subr.bf16.mxu0 0
    %687 = vmatpush1.bf16.msra.mxu0 %v499
    %688 = vmatprep.subr.bf16.mxu0 0
    %689 = vmatpush1.bf16.msra.mxu0 %v500
    %690 = vmatprep.subr.bf16.mxu0 0
    %691 = vmatpush1.bf16.msra.mxu0 %v501
    %692 = vmatprep.subr.bf16.mxu0 0
    %693 = vmatpush1.bf16.msra.mxu0 %v502
    %694 = vmatprep.subr.bf16.mxu0 0
    %695 = vmatpush1.bf16.msra.mxu0 %v503
    %696 = vmatprep.mubr.bf16.mxu0 %v69
    %697 = vmatmul.mubr.bf16.gmra.mrb[0].mxu0 %v68
    %v698 = vpop.f32.mrb[0].mxu0
    %v699 = vadd.f32 %v659, %v698
    %v700 = vpop.f32.mrb[0].mxu0
    %v701 = vpop.f32.mrb[0].mxu0
    %v702 = vpop.f32.mrb[0].mxu0
    %703 = vdwg.mxu0
    %704 = vmatprep.subr.bf16.mxu0 0
    %705 = vmatpush1.bf16.msra.mxu0 %v504
    %706 = vmatprep.subr.bf16.mxu0 0
    %707 = vmatpush1.bf16.msra.mxu0 %v505
    %708 = vmatprep.subr.bf16.mxu0 0
    %709 = vmatpush1.bf16.msra.mxu0 %v506
    %710 = vmatprep.subr.bf16.mxu0 0
    %711 = vmatpush1.bf16.msra.mxu0 %v507
    %712 = vmatprep.subr.bf16.mxu0 0
    %713 = vmatpush1.bf16.msra.mxu0 %v508
    %714 = vmatprep.subr.bf16.mxu0 0
    %715 = vmatpush1.bf16.msra.mxu0 %v509
    %716 = vmatprep.subr.bf16.mxu0 0
    %717 = vmatpush1.bf16.msra.mxu0 %v510
    %718 = vmatprep.subr.bf16.mxu0 0
    %719 = vmatpush1.bf16.msra.mxu0 %v511
    %720 = vmatprep.subr.bf16.mxu0 0
    %721 = vmatpush1.bf16.msra.mxu0 %v512
    %722 = vmatprep.subr.bf16.mxu0 0
    %723 = vmatpush1.bf16.msra.mxu0 %v513
    %724 = vmatprep.subr.bf16.mxu0 0
    %725 = vmatpush1.bf16.msra.mxu0 %v514
    %726 = vmatprep.subr.bf16.mxu0 0
    %727 = vmatpush1.bf16.msra.mxu0 %v515
    %728 = vmatprep.subr.bf16.mxu0 0
    %729 = vmatpush1.bf16.msra.mxu0 %v516
    %730 = vmatprep.subr.bf16.mxu0 0
    %731 = vmatpush1.bf16.msra.mxu0 %v517
    %732 = vmatprep.subr.bf16.mxu0 0
    %733 = vmatpush1.bf16.msra.mxu0 %v518
    %734 = vmatprep.subr.bf16.mxu0 0
    %735 = vmatpush1.bf16.msra.mxu0 %v519
    %736 = vmatprep.mubr.bf16.mxu0 %v71
    %737 = vmatmul.mubr.bf16.gmra.mrb[0].mxu0 %v70
    %v738 = vpop.f32.mrb[0].mxu0
    %v739 = vadd.f32 %v699, %v738
    %v740 = vpop.f32.mrb[0].mxu0
    %v741 = vpop.f32.mrb[0].mxu0
    %v742 = vpop.f32.mrb[0].mxu0
    %743 = vdwg.mxu0
    %v744 = vlaneseq
    %v745 = vand.u32 %v744, 127
    %vm746 = vcmp.lt.s32.totalorder %v745, 52
    %v747 = vsel %vm746, %v739, -1e+30
    %vm748 = vcmask 427008
    %v749 = vsel %vm748, %v747, -inf
    %750 = vmax.xlane.f32.xlu0 %v749
    %v751 = vpop.xlane.xlu0 %750
    %v752 = vsub.f32 %v739, %v751
    %v753 = vmul.f32 %v752, 1.442695
    %v754 = vpow.pop %v753
    %v755 = vsel %vm746, %v754, 0.0
    %v756 = vsel %vm748, %v755, 0.0
    %757 = vadd.xlane.f32.xlu0 %v756
    %v758 = vpop.xlane.xlu0 %757
    %v759 = vlog2.pop %v758
    %v760 = vmul.f32 %v759, 0.6931472
    %v761 = vadd.f32 %v760, %v751
    %v762 = vstv %s17
    %vm763 = vcmp.eq.s32.totalorder %v745, %v762
    %v764 = vsel %vm763, %v739, 0.0
    %v765 = vsel %vm748, %v764, 0.0
    %766 = vadd.xlane.f32.xlu0 %v765
    %v767 = vpop.xlane.xlu0 %766
    %v768 = vsub.f32 %v761, %v767
    %vm769 = vcmask 1024
    %v770 = vsel %vm769, %v768, 0.0
    %771 = vadd.xlane.f32.xlu0 %v770
    %v772 = vpop.xlane.xlu0 %771
    %v773 = vrot.slane %v772, 4
    %v774 = vadd.f32 %v772, %v773
    %v775 = vrot.slane %v774, 2
    %v776 = vadd.f32 %v774, %v775
    %v777 = vrot.slane %v776, 1
    %v778 = vadd.f32 %v776, %v777
    %s779 = vtos %v778
    %v780 = vrcp.pop 2.0
    %s781 = vtos %v780
    %s782 = smul.f32 %s779, %s781
    %vm783 = vcmp.eq.s32.totalorder %v745, 52
    %v784 = vsel %vm783, %v739, 0.0
    %v785 = vsel %vm748, %v784, 0.0
    %786 = vadd.xlane.f32.xlu0 %v785
    %v787 = vpop.xlane.xlu0 %786
    %v788 = vrot.slane %v787, 4
    %v789 = vadd.f32 %v787, %v788
    %v790 = vrot.slane %v789, 2
    %v791 = vadd.f32 %v789, %v790
    %v792 = vrot.slane %v791, 1
    %v793 = vadd.f32 %v791, %v792
    %s794 = vtos %v793
    %vm795 = vcmp.eq.s32.totalorder %v745, 0
    %vm796 = vcmp.eq.s32.totalorder %v745, 1
    %v797 = vstv %s794
    %v798 = vsel %vm796, %v797, 0.0
    %v799 = vstv %s782
    %v800 = vsel %vm795, %v799, %v798
    %801 = vst [vmem:[#allocation3] sm:$0x1] %v800
    // Predicated region
    $region14: #{tpu_custom_call.1} parent=1 // pred_check
      _
    $region15: #{tpu_custom_call.1} parent=1 // pred_check_branch
      %803 = sbr.rel (0) target = $region17
    $region16: #{tpu_custom_call.1} parent=1 // pred_region
      %s805 = ssub.s32 16, 16
      %806 = vsyncadd [#allocation4], %s805
      %s808 = sshll.u32 [#allocation3], 4
      %s809 = int_to_ptr.vmem [resolvable:$true] %s808
      %811 = dma.vmem_to_hbm [thread:$0]  %s809, 16, %s3, [#allocation4]
    $region17: #{tpu_custom_call.1} parent=1 // pred_fallthru
      _
    // Predicated region
    $region18: #{tpu_custom_call.1} parent=1 // pred_check
      _
    $region19: #{tpu_custom_call.1} parent=1 // pred_check_branch
      %813 = sbr.rel (0) target = $region21
    $region20: #{tpu_custom_call.1} parent=1 // pred_region
      %814 = dma.done [#allocation4], 16
    $region21: #{tpu_custom_call.1} parent=1 // pred_fallthru
      _
    %815 = vsyncpa [#allocation4], 1

</llo_original>
